<compile_context>
chip_gen: v7x
topology: tpu7x:2x2x1
jax: 0.10.0
libtpu: 0.0.40
codegen_flags: <defaults>
</compile_context>

<pallas_src>
import functools

import jax
import jax.numpy as jnp
from jax.experimental import pallas as pl
from jax.experimental.pallas import tpu as pltpu


ACT_DTYPE = jnp.bfloat16          # inter-kernel activation storage (HBM bytes / 2)
VMEM_LIMIT = 32 * 1024 * 1024     # explicit scoped-VMEM limit, safe on v5e/v6e/v7x
GN_EPS = 1e-5


# ----------------------------------------------------------------------------
# In-kernel math helpers (traced inline inside Pallas kernels)
# ----------------------------------------------------------------------------

def _erf_poly(x):
    """Abramowitz-Stegun 7.1.26 erf approximation (|err| < 1.5e-7); only uses
    mul/add/exp/div so it lowers cleanly in Mosaic."""
    ax = jnp.abs(x)
    t = 1.0 / (1.0 + 0.3275911 * ax)
    poly = ((((1.061405429 * t - 1.453152027) * t + 1.421413741) * t
             - 0.284496736) * t + 0.254829592) * t
    y = 1.0 - poly * jnp.exp(-ax * ax)
    return jnp.where(x >= 0, y, -y)


def _gelu_exact(x):
    # nn.GELU default is exact-erf; use a 1.5e-7-accurate erf polynomial in
    # kernel instead of dropping out to an XLA erf pass.
    return 0.5 * x * (1.0 + _erf_poly(x * 0.7071067811865476))


def _finish_block(acc, Ho, Wo, x1_scr, dwb, gnw, gnb, w2, b2, w3, b3):
    """Shared epilogue: flatten spatial -> rows, GroupNorm(num_groups=C) over
    the spatial extent of one sample, expand 1x1 + GELU + contract 1x1.

    `acc` is the f32 depthwise-conv output (Ho, Wo, C); returns y (Ho*Wo, Cout).
    The flatten is done with unrolled row stores into the VMEM scratch
    `x1_scr` (shape (Ho*Wo, C)) to avoid a non-aligned in-kernel reshape."""
    M2 = Ho * Wo
    for h in range(Ho):                       # static unroll (small spatial)
        x1_scr[h * Wo:(h + 1) * Wo, :] = acc[h]
    a2 = x1_scr[...] + dwb                    # (M2, C); bias is a no-op under GN
    inv = 1.0 / float(M2)
    mean = jnp.sum(a2, axis=0, keepdims=True) * inv
    d = a2 - mean
    var = jnp.sum(d * d, axis=0, keepdims=True) * inv   # biased var, like torch
    x1 = d * jax.lax.rsqrt(var + GN_EPS) * gnw + gnb
    h1 = jnp.dot(x1, w2, preferred_element_type=jnp.float32) + b2
    h1 = _gelu_exact(h1)
    return jnp.dot(h1, w3, preferred_element_type=jnp.float32) + b3


# ----------------------------------------------------------------------------
# Pallas kernels (cached per static shape so identical shapes compile once)
# ----------------------------------------------------------------------------

@functools.lru_cache(maxsize=None)
def _pointwise_call(M, Cin, Cout, out_dtype_name):
    """Single 1x1 conv: (M, Cin) @ (Cin, Cout) + bias, tiled over M."""
    out_dtype = jnp.dtype(out_dtype_name)
    tm = M if M <= 512 else 512

    def kernel(x_ref, w_ref, b_ref, o_ref):
        x = x_ref[...].astype(jnp.float32)
        y = jnp.dot(x, w_ref[...], preferred_element_type=jnp.float32) + b_ref[...]
        o_ref[...] = y.astype(o_ref.dtype)

    fn = pl.pallas_call(
        kernel,
        grid=(pl.cdiv(M, tm),),
        in_specs=[
            pl.BlockSpec((tm, Cin), lambda i: (i, 0)),
            pl.BlockSpec((Cin, Cout), lambda i: (0, 0)),
            pl.BlockSpec((1, Cout), lambda i: (0, 0)),
        ],
        out_specs=pl.BlockSpec((tm, Cout), lambda i: (i, 0)),
        out_shape=jax.ShapeDtypeStruct((M, Cout), out_dtype),
        compiler_params=pltpu.CompilerParams(
            dimension_semantics=("parallel",), vmem_limit_bytes=VMEM_LIMIT),
    )
    return jax.jit(fn)


def pointwise(x2d, w, b, out_dtype=ACT_DTYPE):
    M, Cin = x2d.shape
    Cout = w.shape[1]
    call = _pointwise_call(M, Cin, Cout, jnp.dtype(out_dtype).name)
    return call(x2d, w, b.reshape(1, Cout))


@functools.lru_cache(maxsize=None)
def _block_s1_call(N, Hp, Wp, C, K, Ce, Cout, with_res):
    """Fully fused MedNeXtBlock (stride 1) on a pre-padded NHWC input:
    depthwise KxK conv (+bias) -> GroupNorm(C groups) -> expand 1x1 -> GELU ->
    contract 1x1 (+ residual from the unpadded input).  One grid step per
    sample; the only HBM traffic is the padded input tile, the weights and
    the (Ho*Wo, Cout) output."""
    Ho, Wo = Hp - K + 1, Wp - K + 1
    M2 = Ho * Wo
    pad = K // 2

    def kernel(xp_ref, dww_ref, dwb_ref, gnw_ref, gnb_ref,
               w2_ref, b2_ref, w3_ref, b3_ref, o_ref, x1_scr):
        x = xp_ref[...].astype(jnp.float32)            # (Hp, Wp, C)
        w = dww_ref[...]                               # (K, K, C) f32
        acc = jnp.zeros((Ho, Wo, C), jnp.float32)
        for kh in range(K):                            # static unroll
            for kw in range(K):
                acc = acc + x[kh:kh + Ho, kw:kw + Wo, :] * w[kh:kh + 1, kw:kw + 1, :]
        y = _finish_block(acc, Ho, Wo, x1_scr, dwb_ref[...], gnw_ref[...],
                          gnb_ref[...], w2_ref[...], b2_ref[...],
                          w3_ref[...], b3_ref[...])
        if with_res:
            # residual = original (unpadded) block input; Cout == C here.
            res = x[pad:pad + Ho, pad:pad + Wo, :]
            for h in range(Ho):
                o_ref[h * Wo:(h + 1) * Wo, :] = (
                    y[h * Wo:(h + 1) * Wo, :] + res[h]).astype(o_ref.dtype)
        else:
            o_ref[...] = y.astype(o_ref.dtype)

    in_specs = [
        pl.BlockSpec((None, Hp, Wp, C), lambda n: (n, 0, 0, 0)),
        pl.BlockSpec((K, K, C), lambda n: (0, 0, 0)),
        pl.BlockSpec((1, C), lambda n: (0, 0)),
        pl.BlockSpec((1, C), lambda n: (0, 0)),
        pl.BlockSpec((1, C), lambda n: (0, 0)),
        pl.BlockSpec((C, Ce), lambda n: (0, 0)),
        pl.BlockSpec((1, Ce), lambda n: (0, 0)),
        pl.BlockSpec((Ce, Cout), lambda n: (0, 0)),
        pl.BlockSpec((1, Cout), lambda n: (0, 0)),
    ]
    fn = pl.pallas_call(
        kernel,
        grid=(N,),
        in_specs=in_specs,
        out_specs=pl.BlockSpec((None, M2, Cout), lambda n: (n, 0, 0)),
        out_shape=jax.ShapeDtypeStruct((N, M2, Cout), ACT_DTYPE),
        scratch_shapes=[pltpu.VMEM((M2, C), jnp.float32)],
        compiler_params=pltpu.CompilerParams(
            dimension_semantics=("parallel",), vmem_limit_bytes=VMEM_LIMIT),
    )
    return jax.jit(fn)


@functools.lru_cache(maxsize=None)
def _block_s2_call(N, Hq, Wq, C, K, Ho, Wo, Ce, Cout):
    """Fully fused MedNeXtDownBlock (stride-2 depthwise conv via polyphase
    decomposition of the padded input, so only strided outputs are computed)
    + GroupNorm + expand/GELU/contract.  No residual (do_res_up_down=False)."""
    M2 = Ho * Wo

    def kernel(x00_ref, x01_ref, x10_ref, x11_ref, dww_ref, dwb_ref,
               gnw_ref, gnb_ref, w2_ref, b2_ref, w3_ref, b3_ref, o_ref, x1_scr):
        w = dww_ref[...]
        acc = jnp.zeros((Ho, Wo, C), jnp.float32)
        for x_ref, a, bpar in ((x00_ref, 0, 0), (x01_ref, 0, 1),
                               (x10_ref, 1, 0), (x11_ref, 1, 1)):
            xp = x_ref[...].astype(jnp.float32)        # (Hq, Wq, C)
            for qh in range((K - a + 1) // 2):
                kh = 2 * qh + a
                for qw in range((K - bpar + 1) // 2):
                    kw = 2 * qw + bpar
                    acc = acc + xp[qh:qh + Ho, qw:qw + Wo, :] * w[kh:kh + 1, kw:kw + 1, :]
        y = _finish_block(acc, Ho, Wo, x1_scr, dwb_ref[...], gnw_ref[...],
                          gnb_ref[...], w2_ref[...], b2_ref[...],
                          w3_ref[...], b3_ref[...])
        o_ref[...] = y.astype(o_ref.dtype)

    plane_spec = pl.BlockSpec((None, Hq, Wq, C), lambda n: (n, 0, 0, 0))
    in_specs = [plane_spec, plane_spec, plane_spec, plane_spec,
                pl.BlockSpec((K, K, C), lambda n: (0, 0, 0)),
                pl.BlockSpec((1, C), lambda n: (0, 0)),
                pl.BlockSpec((1, C), lambda n: (0, 0)),
                pl.BlockSpec((1, C), lambda n: (0, 0)),
                pl.BlockSpec((C, Ce), lambda n: (0, 0)),
                pl.BlockSpec((1, Ce), lambda n: (0, 0)),
                pl.BlockSpec((Ce, Cout), lambda n: (0, 0)),
                pl.BlockSpec((1, Cout), lambda n: (0, 0))]
    fn = pl.pallas_call(
        kernel,
        grid=(N,),
        in_specs=in_specs,
        out_specs=pl.BlockSpec((None, M2, Cout), lambda n: (n, 0, 0)),
        out_shape=jax.ShapeDtypeStruct((N, M2, Cout), ACT_DTYPE),
        scratch_shapes=[pltpu.VMEM((M2, C), jnp.float32)],
        compiler_params=pltpu.CompilerParams(
            dimension_semantics=("parallel",), vmem_limit_bytes=VMEM_LIMIT),
    )
    return jax.jit(fn)


# ----------------------------------------------------------------------------
# Block wrappers (XLA glue: padding / parity slicing / dilation — all tiny)
# ----------------------------------------------------------------------------

def _block_args(p, C, Ce, Cout):
    return (p["dw_w"], p["dw_b"].reshape(1, C), p["gn_w"].reshape(1, C),
            p["gn_b"].reshape(1, C), p["w2"], p["b2"].reshape(1, Ce),
            p["w3"], p["b3"].reshape(1, Cout))


def mednext_block(x, p, K, do_res):
    """MedNeXtBlock: dwconv+GN -> expand 1x1 -> GELU -> contract 1x1 (+res)."""
    N, H, W, C = x.shape
    pad = K // 2
    # TODO(synk): move halo padding into the kernel (masked edge taps) and
    # H-tile with halos + two-pass GN stats for large spatial extents
    # (v7x has only 64 MiB VMEM per TC); whole-sample tiles are fine here.
    xp = jnp.pad(x, ((0, 0), (pad, pad), (pad, pad), (0, 0)))
    Ce, Cout = p["w2"].shape[1], p["w3"].shape[1]
    if do_res:
        assert Cout == C, "residual requires in_channels == out_channels"
    call = _block_s1_call(N, H + 2 * pad, W + 2 * pad, C, K, Ce, Cout, do_res)
    y = call(xp, *_block_args(p, C, Ce, Cout))
    return y.reshape(N, H, W, Cout)


def down_block(x, p, K):
    """MedNeXtDownBlock (do_res_up_down=False): stride-2 dwconv, no residual."""
    N, H, W, C = x.shape
    assert H % 2 == 0 and W % 2 == 0, "stride-2 path requires even spatial dims"
    pad = K // 2
    xp = jnp.pad(x, ((0, 0), (pad, pad), (pad, pad), (0, 0)))
    planes = tuple(xp[:, a::2, bb::2, :] for a in (0, 1) for bb in (0, 1))
    Hq, Wq = planes[0].shape[1], planes[0].shape[2]
    Ho, Wo = H // 2, W // 2
    Ce, Cout = p["w2"].shape[1], p["w3"].shape[1]
    call = _block_s2_call(N, Hq, Wq, C, K, Ho, Wo, Ce, Cout)
    y = call(*planes, *_block_args(p, C, Ce, Cout))
    return y.reshape(N, Ho, Wo, Cout)


def up_block(x, p, K):
    """MedNeXtUpBlock (do_res_up_down=False): transposed stride-2 dwconv via
    dilate-by-2 + pad + correlation with the flipped kernel, then the fused
    GN/MLP, then F.pad((1,0,1,0)) like the PyTorch block."""
    N, H, W, C = x.shape
    xd = jnp.zeros((N, 2 * H - 1, 2 * W - 1, C), x.dtype).at[:, ::2, ::2, :].set(x)
    pp = K - 1 - K // 2
    xp = jnp.pad(xd, ((0, 0), (pp, pp), (pp, pp), (0, 0)))
    # TODO(synk): polyphase transposed conv (4 output parities) would avoid the
    # dilated intermediate and the multiplies against zeros; negligible here.
    wf = p["dw_w"][::-1, ::-1, :]
    _, Hp, Wp, _ = xp.shape
    Ho, Wo = Hp - K + 1, Wp - K + 1          # = 2H-1, 2W-1
    Ce, Cout = p["w2"].shape[1], p["w3"].shape[1]
    call = _block_s1_call(N, Hp, Wp, C, K, Ce, Cout, False)
    args = _block_args(p, C, Ce, Cout)
    y = call(xp, wf, *args[1:]).reshape(N, Ho, Wo, Cout)
    return jnp.pad(y, ((0, 0), (1, 0), (1, 0), (0, 0)))


# ----------------------------------------------------------------------------
# Parameter init (deterministic, synthetic; weights kept in f32)
# ----------------------------------------------------------------------------

def _init_block(key, in_c, out_c, exp_r, K, scale=0.1):
    ks = jax.random.split(key, 6)
    return {
        "dw_w": scale * jax.random.normal(ks[0], (K, K, in_c), jnp.float32),
        "dw_b": scale * jax.random.normal(ks[1], (in_c,), jnp.float32),
        "gn_w": jnp.ones((in_c,), jnp.float32),
        "gn_b": jnp.zeros((in_c,), jnp.float32),
        "w2": scale * jax.random.normal(ks[2], (in_c, exp_r * in_c), jnp.float32),
        "b2": scale * jax.random.normal(ks[3], (exp_r * in_c,), jnp.float32),
        "w3": scale * jax.random.normal(ks[4], (exp_r * in_c, out_c), jnp.float32),
        "b3": scale * jax.random.normal(ks[5], (out_c,), jnp.float32),
    }


def init_mednext_params(key, input_channels, n_channels, num_classes, exp_r, K, block_counts):
    ch = [n_channels * (2 ** i) for i in range(5)]
    keys = iter(jax.random.split(key, 64))
    p = {}
    p["stem_w"] = 0.1 * jax.random.normal(next(keys), (input_channels, n_channels), jnp.float32)
    p["stem_b"] = 0.1 * jax.random.normal(next(keys), (n_channels,), jnp.float32)
    p["enc"] = [
        [_init_block(next(keys), ch[i], ch[i], exp_r, K) for _ in range(block_counts[i])]
        for i in range(4)
    ]
    p["down"] = [_init_block(next(keys), ch[i], ch[i + 1], exp_r, K) for i in range(4)]
    p["bottleneck"] = [
        _init_block(next(keys), ch[4], ch[4], exp_r, K) for _ in range(block_counts[4])
    ]
    p["up"] = [_init_block(next(keys), ch[4 - i], ch[3 - i], exp_r, K) for i in range(4)]
    p["dec"] = [
        [_init_block(next(keys), ch[3 - i], ch[3 - i], exp_r, K) for _ in range(block_counts[5 + i])]
        for i in range(4)
    ]
    p["out_w"] = 0.1 * jax.random.normal(next(keys), (n_channels, num_classes), jnp.float32)
    p["out_b"] = 0.1 * jax.random.normal(next(keys), (num_classes,), jnp.float32)
    return p


# ----------------------------------------------------------------------------
# Full forward (mirrors MedNeXt.forward, deep_supervision=False)
# ----------------------------------------------------------------------------

def mednext_forward(params, x_nchw, K, do_res=True):
    x = jnp.transpose(x_nchw, (0, 2, 3, 1)).astype(ACT_DTYPE)     # NCHW -> NHWC, bf16
    N, H, W, Cin = x.shape
    n_ch = params["stem_w"].shape[1]

    # stem: 1x1 conv
    x = pointwise(x.reshape(N * H * W, Cin), params["stem_w"], params["stem_b"])
    x = x.reshape(N, H, W, n_ch)

    skips = []
    for i in range(4):
        for bp in params["enc"][i]:
            x = mednext_block(x, bp, K, do_res=do_res)
        skips.append(x)
        x = down_block(x, params["down"][i], K)

    for bp in params["bottleneck"]:
        x = mednext_block(x, bp, K, do_res=do_res)

    for i in range(4):                       # up_3..up_0 / dec_block_3..dec_block_0
        xu = up_block(x, params["up"][i], K)
        x = skips[3 - i] + xu
        for bp in params["dec"][i]:
            x = mednext_block(x, bp, K, do_res=do_res)

    # out_0: ConvTranspose2d(kernel_size=1) == 1x1 conv with weight (Cin, Cout)
    N2, H2, W2, C2 = x.shape
    out = pointwise(x.reshape(N2 * H2 * W2, C2), params["out_w"], params["out_b"],
                    out_dtype=jnp.float32)
    out = out.reshape(N2, H2, W2, -1)
    return jnp.transpose(out, (0, 3, 1, 2))  # NHWC -> NCHW


# ----------------------------------------------------------------------------
# Demo
# ----------------------------------------------------------------------------

if __name__ == "__main__":
    key = jax.random.PRNGKey(0)
    kp, kx = jax.random.split(key)

    input_channels, n_channels, num_classes = 4, 8, 3
    exp_r, K = 2, 5
    block_counts = [1] * 9

    params = init_mednext_params(
        kp, input_channels, n_channels, num_classes, exp_r, K, block_counts
    )

    x = jax.random.normal(kx, (2, input_channels, 16, 16), jnp.float32)  # NCHW like PyTorch

    fwd = jax.jit(functools.partial(mednext_forward, K=K, do_res=True))
    y = fwd(params, x)
    y = jax.block_until_ready(y)

    assert y.shape == (2, num_classes, 16, 16), y.shape
    assert bool(jnp.all(jnp.isfinite(y)))
    print("KERNEL_OK")
</pallas_src>

<mosaic_0001>
module attributes {stable_mosaic.version = 11 : i64} {
  func.func @kernel(%arg0: i32, %arg1: memref<512x4xbf16, #tpu.memory_space<vmem>>, %arg2: memref<4x8xf32, #tpu.memory_space<vmem>>, %arg3: memref<1x8xf32, #tpu.memory_space<vmem>>, %arg4: memref<512x8xbf16, #tpu.memory_space<vmem>>) attributes {dimension_semantics = [#tpu.dimension_semantics<parallel>], iteration_bounds = array<i64: 1>, scalar_prefetch = 0 : i64, scratch_operands = 0 : i64, tpu.core_type = #tpu.core_type<tc>, window_params = [{transform_indices = @transform_0, window_bounds = array<i64: 512, 4>}, {pipeline_mode = #tpu.pipeline_mode<synchronous>, transform_indices = @transform_1, window_bounds = array<i64: 4, 8>}, {pipeline_mode = #tpu.pipeline_mode<synchronous>, transform_indices = @transform_2, window_bounds = array<i64: 1, 8>}, {transform_indices = @transform_3, window_bounds = array<i64: 512, 8>}]} {
    %c0 = arith.constant 0 : index
    %c0_0 = arith.constant 0 : index
    %0 = vector.load %arg1[%c0, %c0_0] : memref<512x4xbf16, #tpu.memory_space<vmem>>, vector<512x4xbf16>
    %1 = arith.extf %0 : vector<512x4xbf16> to vector<512x4xf32>
    %c0_1 = arith.constant 0 : index
    %c0_2 = arith.constant 0 : index
    %2 = vector.load %arg2[%c0_1, %c0_2] : memref<4x8xf32, #tpu.memory_space<vmem>>, vector<4x8xf32>
    %cst = arith.constant dense<0.000000e+00> : vector<512x8xf32>
    %3 = tpu.matmul %1, %2, %cst {dimension_numbers = #tpu.dot_dimension_numbers<[1], [0], [0], [1], [0, 0, 1, 1], [], []>} : vector<512x4xf32>, vector<4x8xf32>, vector<512x8xf32> -> vector<512x8xf32>
    %c0_3 = arith.constant 0 : index
    %c0_4 = arith.constant 0 : index
    %4 = vector.load %arg3[%c0_3, %c0_4] : memref<1x8xf32, #tpu.memory_space<vmem>>, vector<1x8xf32>
    %5 = vector.broadcast %4 : vector<1x8xf32> to vector<512x8xf32>
    %6 = arith.addf %3, %5 : vector<512x8xf32>
    %7 = arith.truncf %6 : vector<512x8xf32> to vector<512x8xbf16>
    %c0_5 = arith.constant 0 : index
    %c0_6 = arith.constant 0 : index
    %8 = vector.load %arg4[%c0_5, %c0_6] : memref<512x8xbf16, #tpu.memory_space<vmem>>, vector<512x8xbf16>
    tpu.vector_store %arg4[%c0_5, %c0_6], %7 {strides = array<i32>} : memref<512x8xbf16, #tpu.memory_space<vmem>>, vector<512x8xbf16>,
    return
  }
  func.func @transform_0(%arg0: i32) -> (i32, i32) {
    %c0_i32 = arith.constant 0 : i32
    %c0_i32_0 = arith.constant 0 : i32
    return %arg0, %c0_i32 : i32, i32
  }
  func.func @transform_1(%arg0: i32) -> (i32, i32) {
    %c0_i32 = arith.constant 0 : i32
    %c0_i32_0 = arith.constant 0 : i32
    %c0_i32_1 = arith.constant 0 : i32
    return %c0_i32, %c0_i32_0 : i32, i32
  }
  func.func @transform_2(%arg0: i32) -> (i32, i32) {
    %c0_i32 = arith.constant 0 : i32
    %c0_i32_0 = arith.constant 0 : i32
    %c0_i32_1 = arith.constant 0 : i32
    return %c0_i32, %c0_i32_0 : i32, i32
  }
  func.func @transform_3(%arg0: i32) -> (i32, i32) {
    %c0_i32 = arith.constant 0 : i32
    %c0_i32_0 = arith.constant 0 : i32
    return %arg0, %c0_i32 : i32, i32
  }
}

</mosaic_0001>

<llo_original>
// kernel: tpu_custom_call.1
$region0: #{tpu_custom_call.1}
  #allocation0 [shape = 'u32[]', space=smem, size = 0x4, offset = 0x4, fixed_abs, tag = 'smem constant byte address 0x4 - core index']
  #allocation1 [shape = 'u32[144,128]{1,0:T(1,128)}', space=vmem, size = 0x12000, scoped, tag = 'internal scratch']
  %s0 = inlined_call_operand.vmem [shape: bf16[512,4], index: 0, kind: input, shape index: {}]
  %s1 = inlined_call_operand.vmem [shape: f32[4,8], index: 1, kind: input, shape index: {}]
  %s2 = inlined_call_operand.vmem [shape: f32[1,8], index: 2, kind: input, shape index: {}]
  %s3 = inlined_call_operand.vmem [shape: bf16[512,8], index: 3, kind: output, shape index: {}]
  %s4 = sld [smem:[#allocation0]]
  $region22: #{tpu_custom_call.1} parent=0
    _
  %s6 = ssub.s32 1, %s4
  %s7 = scalar_select 0, %s6, %s4
  // Predicated region
  $region2: #{tpu_custom_call.1} parent=0 // pred_check
    _
  $region3: #{tpu_custom_call.1} parent=0 // pred_check_branch
    %9 = sbr.rel (0) target = $region5
  $region4: #{tpu_custom_call.1} parent=0 // pred_region
    _
  $region5: #{tpu_custom_call.1} parent=0 // pred_fallthru
    _
  // Predicated region
  $region6: #{tpu_custom_call.1} parent=0 // pred_check
    _
  $region7: #{tpu_custom_call.1} parent=0 // pred_check_branch
    %11 = sbr.rel (0) target = $region9
  $region8: #{tpu_custom_call.1} parent=0 // pred_region
    _
  $region9: #{tpu_custom_call.1} parent=0 // pred_fallthru
    _
  // Predicated region
  $region10: #{tpu_custom_call.1} parent=0 // pred_check
    _
  $region11: #{tpu_custom_call.1} parent=0 // pred_check_branch
    %13 = sbr.rel (0) target = $region13
  $region12: #{tpu_custom_call.1} parent=0 // pred_region
    _
  $region13: #{tpu_custom_call.1} parent=0 // pred_fallthru
    _
  %v14 = vld [vmem:[%s0] sm:$0xf]
  %v15 = vld [vmem:[%s0 + $0x4] sm:$0xf]
  %v16 = vld [vmem:[%s0 + $0x8] sm:$0xf]
  %v17 = vld [vmem:[%s0 + $0xc] sm:$0xf]
  %v18 = vld [vmem:[%s0 + $0x10] sm:$0xf]
  %v19 = vld [vmem:[%s0 + $0x14] sm:$0xf]
  %v20 = vld [vmem:[%s0 + $0x18] sm:$0xf]
  %v21 = vld [vmem:[%s0 + $0x1c] sm:$0xf]
  %v22 = vld [vmem:[%s0 + $0x20] sm:$0xf]
  %v23 = vld [vmem:[%s0 + $0x24] sm:$0xf]
  %v24 = vld [vmem:[%s0 + $0x28] sm:$0xf]
  %v25 = vld [vmem:[%s0 + $0x2c] sm:$0xf]
  %v26 = vld [vmem:[%s0 + $0x30] sm:$0xf]
  %v27 = vld [vmem:[%s0 + $0x34] sm:$0xf]
  %v28 = vld [vmem:[%s0 + $0x38] sm:$0xf]
  %v29 = vld [vmem:[%s0 + $0x3c] sm:$0xf]
  %v30 = vld [vmem:[%s0 + $0x40] sm:$0xf]
  %v31 = vld [vmem:[%s0 + $0x44] sm:$0xf]
  %v32 = vld [vmem:[%s0 + $0x48] sm:$0xf]
  %v33 = vld [vmem:[%s0 + $0x4c] sm:$0xf]
  %v34 = vld [vmem:[%s0 + $0x50] sm:$0xf]
  %v35 = vld [vmem:[%s0 + $0x54] sm:$0xf]
  %v36 = vld [vmem:[%s0 + $0x58] sm:$0xf]
  %v37 = vld [vmem:[%s0 + $0x5c] sm:$0xf]
  %v38 = vld [vmem:[%s0 + $0x60] sm:$0xf]
  %v39 = vld [vmem:[%s0 + $0x64] sm:$0xf]
  %v40 = vld [vmem:[%s0 + $0x68] sm:$0xf]
  %v41 = vld [vmem:[%s0 + $0x6c] sm:$0xf]
  %v42 = vld [vmem:[%s0 + $0x70] sm:$0xf]
  %v43 = vld [vmem:[%s0 + $0x74] sm:$0xf]
  %v44 = vld [vmem:[%s0 + $0x78] sm:$0xf]
  %v45 = vld [vmem:[%s0 + $0x7c] sm:$0xf]
  %v46 = vld [vmem:[%s0 + $0x80] sm:$0xf]
  %v47 = vld [vmem:[%s0 + $0x84] sm:$0xf]
  %v48 = vld [vmem:[%s0 + $0x88] sm:$0xf]
  %v49 = vld [vmem:[%s0 + $0x8c] sm:$0xf]
  %v50 = vld [vmem:[%s0 + $0x90] sm:$0xf]
  %v51 = vld [vmem:[%s0 + $0x94] sm:$0xf]
  %v52 = vld [vmem:[%s0 + $0x98] sm:$0xf]
  %v53 = vld [vmem:[%s0 + $0x9c] sm:$0xf]
  %v54 = vld [vmem:[%s0 + $0xa0] sm:$0xf]
  %v55 = vld [vmem:[%s0 + $0xa4] sm:$0xf]
  %v56 = vld [vmem:[%s0 + $0xa8] sm:$0xf]
  %v57 = vld [vmem:[%s0 + $0xac] sm:$0xf]
  %v58 = vld [vmem:[%s0 + $0xb0] sm:$0xf]
  %v59 = vld [vmem:[%s0 + $0xb4] sm:$0xf]
  %v60 = vld [vmem:[%s0 + $0xb8] sm:$0xf]
  %v61 = vld [vmem:[%s0 + $0xbc] sm:$0xf]
  %v62 = vld [vmem:[%s0 + $0xc0] sm:$0xf]
  %v63 = vld [vmem:[%s0 + $0xc4] sm:$0xf]
  %v64 = vld [vmem:[%s0 + $0xc8] sm:$0xf]
  %v65 = vld [vmem:[%s0 + $0xcc] sm:$0xf]
  %v66 = vld [vmem:[%s0 + $0xd0] sm:$0xf]
  %v67 = vld [vmem:[%s0 + $0xd4] sm:$0xf]
  %v68 = vld [vmem:[%s0 + $0xd8] sm:$0xf]
  %v69 = vld [vmem:[%s0 + $0xdc] sm:$0xf]
  %v70 = vld [vmem:[%s0 + $0xe0] sm:$0xf]
  %v71 = vld [vmem:[%s0 + $0xe4] sm:$0xf]
  %v72 = vld [vmem:[%s0 + $0xe8] sm:$0xf]
  %v73 = vld [vmem:[%s0 + $0xec] sm:$0xf]
  %v74 = vld [vmem:[%s0 + $0xf0] sm:$0xf]
  %v75 = vld [vmem:[%s0 + $0xf4] sm:$0xf]
  %v76 = vld [vmem:[%s0 + $0xf8] sm:$0xf]
  %v77 = vld [vmem:[%s0 + $0xfc] sm:$0xf]
  %v78 = vunpack.c.l.bf16 %v14
  %v79 = vunpack.c.l.bf16 %v15
  %v80 = vunpack.c.l.bf16 %v16
  %v81 = vunpack.c.l.bf16 %v17
  %v82 = vunpack.c.l.bf16 %v18
  %v83 = vunpack.c.l.bf16 %v19
  %v84 = vunpack.c.l.bf16 %v20
  %v85 = vunpack.c.l.bf16 %v21
  %v86 = vunpack.c.l.bf16 %v22
  %v87 = vunpack.c.l.bf16 %v23
  %v88 = vunpack.c.l.bf16 %v24
  %v89 = vunpack.c.l.bf16 %v25
  %v90 = vunpack.c.l.bf16 %v26
  %v91 = vunpack.c.l.bf16 %v27
  %v92 = vunpack.c.l.bf16 %v28
  %v93 = vunpack.c.l.bf16 %v29
  %v94 = vunpack.c.l.bf16 %v30
  %v95 = vunpack.c.l.bf16 %v31
  %v96 = vunpack.c.l.bf16 %v32
  %v97 = vunpack.c.l.bf16 %v33
  %v98 = vunpack.c.l.bf16 %v34
  %v99 = vunpack.c.l.bf16 %v35
  %v100 = vunpack.c.l.bf16 %v36
  %v101 = vunpack.c.l.bf16 %v37
  %v102 = vunpack.c.l.bf16 %v38
  %v103 = vunpack.c.l.bf16 %v39
  %v104 = vunpack.c.l.bf16 %v40
  %v105 = vunpack.c.l.bf16 %v41
  %v106 = vunpack.c.l.bf16 %v42
  %v107 = vunpack.c.l.bf16 %v43
  %v108 = vunpack.c.l.bf16 %v44
  %v109 = vunpack.c.l.bf16 %v45
  %v110 = vunpack.c.l.bf16 %v46
  %v111 = vunpack.c.l.bf16 %v47
  %v112 = vunpack.c.l.bf16 %v48
  %v113 = vunpack.c.l.bf16 %v49
  %v114 = vunpack.c.l.bf16 %v50
  %v115 = vunpack.c.l.bf16 %v51
  %v116 = vunpack.c.l.bf16 %v52
  %v117 = vunpack.c.l.bf16 %v53
  %v118 = vunpack.c.l.bf16 %v54
  %v119 = vunpack.c.l.bf16 %v55
  %v120 = vunpack.c.l.bf16 %v56
  %v121 = vunpack.c.l.bf16 %v57
  %v122 = vunpack.c.l.bf16 %v58
  %v123 = vunpack.c.l.bf16 %v59
  %v124 = vunpack.c.l.bf16 %v60
  %v125 = vunpack.c.l.bf16 %v61
  %v126 = vunpack.c.l.bf16 %v62
  %v127 = vunpack.c.l.bf16 %v63
  %v128 = vunpack.c.l.bf16 %v64
  %v129 = vunpack.c.l.bf16 %v65
  %v130 = vunpack.c.l.bf16 %v66
  %v131 = vunpack.c.l.bf16 %v67
  %v132 = vunpack.c.l.bf16 %v68
  %v133 = vunpack.c.l.bf16 %v69
  %v134 = vunpack.c.l.bf16 %v70
  %v135 = vunpack.c.l.bf16 %v71
  %v136 = vunpack.c.l.bf16 %v72
  %v137 = vunpack.c.l.bf16 %v73
  %v138 = vunpack.c.l.bf16 %v74
  %v139 = vunpack.c.l.bf16 %v75
  %v140 = vunpack.c.l.bf16 %v76
  %v141 = vunpack.c.l.bf16 %v77
  %v142 = vld [vmem:[%s1] sm:$0xf]
  %v143 = vld [vmem:[%s2] sm:$0x1]
  %v145 = vlaneseq
  %v146 = vshrl.u32 %v145, 7
  %v147 = vsub.s32 0, %v146
  %v148 = vrot.slane %v143, %v147
  %vm150 = vcmask 31744
  %v152 = vsel %vm150, %v78, 0
  %v155 = vsel %vm150, %v79, 0
  %v158 = vsel %vm150, %v80, 0
  %v161 = vsel %vm150, %v81, 0
  %v164 = vsel %vm150, %v82, 0
  %v167 = vsel %vm150, %v83, 0
  %v170 = vsel %vm150, %v84, 0
  %v173 = vsel %vm150, %v85, 0
  %v176 = vsel %vm150, %v86, 0
  %v179 = vsel %vm150, %v87, 0
  %v182 = vsel %vm150, %v88, 0
  %v185 = vsel %vm150, %v89, 0
  %v188 = vsel %vm150, %v90, 0
  %v191 = vsel %vm150, %v91, 0
  %v194 = vsel %vm150, %v92, 0
  %v197 = vsel %vm150, %v93, 0
  %v200 = vsel %vm150, %v94, 0
  %v203 = vsel %vm150, %v95, 0
  %v206 = vsel %vm150, %v96, 0
  %v209 = vsel %vm150, %v97, 0
  %v212 = vsel %vm150, %v98, 0
  %v215 = vsel %vm150, %v99, 0
  %v218 = vsel %vm150, %v100, 0
  %v221 = vsel %vm150, %v101, 0
  %v224 = vsel %vm150, %v102, 0
  %v227 = vsel %vm150, %v103, 0
  %v230 = vsel %vm150, %v104, 0
  %v233 = vsel %vm150, %v105, 0
  %v236 = vsel %vm150, %v106, 0
  %v239 = vsel %vm150, %v107, 0
  %v242 = vsel %vm150, %v108, 0
  %v245 = vsel %vm150, %v109, 0
  %v248 = vsel %vm150, %v110, 0
  %v251 = vsel %vm150, %v111, 0
  %v254 = vsel %vm150, %v112, 0
  %v257 = vsel %vm150, %v113, 0
  %v260 = vsel %vm150, %v114, 0
  %v263 = vsel %vm150, %v115, 0
  %v266 = vsel %vm150, %v116, 0
  %v269 = vsel %vm150, %v117, 0
  %v272 = vsel %vm150, %v118, 0
  %v275 = vsel %vm150, %v119, 0
  %v278 = vsel %vm150, %v120, 0
  %v281 = vsel %vm150, %v121, 0
  %v284 = vsel %vm150, %v122, 0
  %v287 = vsel %vm150, %v123, 0
  %v290 = vsel %vm150, %v124, 0
  %v293 = vsel %vm150, %v125, 0
  %v296 = vsel %vm150, %v126, 0
  %v299 = vsel %vm150, %v127, 0
  %v302 = vsel %vm150, %v128, 0
  %v305 = vsel %vm150, %v129, 0
  %v308 = vsel %vm150, %v130, 0
  %v311 = vsel %vm150, %v131, 0
  %v314 = vsel %vm150, %v132, 0
  %v317 = vsel %vm150, %v133, 0
  %v320 = vsel %vm150, %v134, 0
  %v323 = vsel %vm150, %v135, 0
  %v326 = vsel %vm150, %v136, 0
  %v329 = vsel %vm150, %v137, 0
  %v332 = vsel %vm150, %v138, 0
  %v335 = vsel %vm150, %v139, 0
  %v338 = vsel %vm150, %v140, 0
  %v341 = vsel %vm150, %v141, 0
  %vm343 = vcmask 1043456
  %v345 = vsel %vm343, %v142, 0
  %347 = vmatprep.subr.mxu0 0.0
  %348 = vmatpush1.msra.mxu0 %v345
  %349 = vmatprep.subr.mxu0 0.0
  %350 = vmatpush1.msra.mxu0 0.0
  %351 = vmatprep.subr.mxu0 0.0
  %352 = vmatpush1.msra.mxu0 0.0
  %353 = vmatprep.subr.mxu0 0.0
  %354 = vmatpush1.msra.mxu0 0.0
  %355 = vmatprep.subr.mxu0 0.0
  %356 = vmatpush1.msra.mxu0 0.0
  %357 = vmatprep.subr.mxu0 0.0
  %358 = vmatpush1.msra.mxu0 0.0
  %359 = vmatprep.subr.mxu0 0.0
  %360 = vmatpush1.msra.mxu0 0.0
  %361 = vmatprep.subr.mxu0 0.0
  %362 = vmatpush1.msra.mxu0 0.0
  %363 = vmatprep.subr.mxu0 0.0
  %364 = vmatpush1.msra.mxu0 0.0
  %365 = vmatprep.subr.mxu0 0.0
  %366 = vmatpush1.msra.mxu0 0.0
  %367 = vmatprep.subr.mxu0 0.0
  %368 = vmatpush1.msra.mxu0 0.0
  %369 = vmatprep.subr.mxu0 0.0
  %370 = vmatpush1.msra.mxu0 0.0
  %371 = vmatprep.subr.mxu0 0.0
  %372 = vmatpush1.msra.mxu0 0.0
  %373 = vmatprep.subr.mxu0 0.0
  %374 = vmatpush1.msra.mxu0 0.0
  %375 = vmatprep.subr.mxu0 0.0
  %376 = vmatpush1.msra.mxu0 0.0
  %377 = vmatprep.subr.mxu0 0.0
  %378 = vmatpush1.msra.mxu0 0.0
  %379 = vmatprep.subr.mxu0 0.0
  %380 = vmatpush1.msra.mxu0 0.0
  %381 = vmatprep.subr.mxu0 0.0
  %382 = vmatpush1.msra.mxu0 0.0
  %383 = vmatprep.subr.mxu0 0.0
  %384 = vmatpush1.msra.mxu0 0.0
  %385 = vmatprep.subr.mxu0 0.0
  %386 = vmatpush1.msra.mxu0 0.0
  %387 = vmatprep.subr.mxu0 0.0
  %388 = vmatpush1.msra.mxu0 0.0
  %389 = vmatprep.subr.mxu0 0.0
  %390 = vmatpush1.msra.mxu0 0.0
  %391 = vmatprep.subr.mxu0 0.0
  %392 = vmatpush1.msra.mxu0 0.0
  %393 = vmatprep.subr.mxu0 0.0
  %394 = vmatpush1.msra.mxu0 0.0
  %395 = vmatprep.subr.mxu0 0.0
  %396 = vmatpush1.msra.mxu0 0.0
  %397 = vmatprep.subr.mxu0 0.0
  %398 = vmatpush1.msra.mxu0 0.0
  %399 = vmatprep.subr.mxu0 0.0
  %400 = vmatpush1.msra.mxu0 0.0
  %401 = vmatprep.subr.mxu0 0.0
  %402 = vmatpush1.msra.mxu0 0.0
  %403 = vmatprep.subr.mxu0 0.0
  %404 = vmatpush1.msra.mxu0 0.0
  %405 = vmatprep.subr.mxu0 0.0
  %406 = vmatpush1.msra.mxu0 0.0
  %407 = vmatprep.subr.mxu0 0.0
  %408 = vmatpush1.msra.mxu0 0.0
  %409 = vmatprep.subr.mxu0 0.0
  %410 = vmatpush1.msra.mxu0 0.0
  %411 = vmatprep.mubr.f32.mxu0 0.0
  %412 = vmatmul.mubr.f32.gmra.mrb[0].mxu0 %v152
  %v413 = vpop.f32.mrb[0].mxu0
  %v414 = vadd.f32 %v148, %v413
  %v415 = vpop.f32.mrb[0].mxu0
  %416 = vmatprep.mubr.f32.mxu0 0.0
  %417 = vmatmul.mubr.f32.gmra.mrb[0].mxu0 %v155
  %v418 = vpop.f32.mrb[0].mxu0
  %v419 = vadd.f32 %v148, %v418
  %v420 = vpop.f32.mrb[0].mxu0
  %421 = vmatprep.mubr.f32.mxu0 0.0
  %422 = vmatmul.mubr.f32.gmra.mrb[0].mxu0 %v158
  %v423 = vpop.f32.mrb[0].mxu0
  %v424 = vadd.f32 %v148, %v423
  %v425 = vpop.f32.mrb[0].mxu0
  %426 = vmatprep.mubr.f32.mxu0 0.0
  %427 = vmatmul.mubr.f32.gmra.mrb[0].mxu0 %v161
  %v428 = vpop.f32.mrb[0].mxu0
  %v429 = vadd.f32 %v148, %v428
  %v430 = vpop.f32.mrb[0].mxu0
  %431 = vmatprep.mubr.f32.mxu0 0.0
  %432 = vmatmul.mubr.f32.gmra.mrb[0].mxu0 %v164
  %v433 = vpop.f32.mrb[0].mxu0
  %v434 = vadd.f32 %v148, %v433
  %v435 = vpop.f32.mrb[0].mxu0
  %436 = vmatprep.mubr.f32.mxu0 0.0
  %437 = vmatmul.mubr.f32.gmra.mrb[0].mxu0 %v167
  %v438 = vpop.f32.mrb[0].mxu0
  %v439 = vadd.f32 %v148, %v438
  %v440 = vpop.f32.mrb[0].mxu0
  %441 = vmatprep.mubr.f32.mxu0 0.0
  %442 = vmatmul.mubr.f32.gmra.mrb[0].mxu0 %v170
  %v443 = vpop.f32.mrb[0].mxu0
  %v444 = vadd.f32 %v148, %v443
  %v445 = vpop.f32.mrb[0].mxu0
  %446 = vmatprep.mubr.f32.mxu0 0.0
  %447 = vmatmul.mubr.f32.gmra.mrb[0].mxu0 %v173
  %v448 = vpop.f32.mrb[0].mxu0
  %v449 = vadd.f32 %v148, %v448
  %v450 = vpop.f32.mrb[0].mxu0
  %451 = vmatprep.mubr.f32.mxu0 0.0
  %452 = vmatmul.mubr.f32.gmra.mrb[0].mxu0 %v176
  %v453 = vpop.f32.mrb[0].mxu0
  %v454 = vadd.f32 %v148, %v453
  %v455 = vpop.f32.mrb[0].mxu0
  %456 = vmatprep.mubr.f32.mxu0 0.0
  %457 = vmatmul.mubr.f32.gmra.mrb[0].mxu0 %v179
  %v458 = vpop.f32.mrb[0].mxu0
  %v459 = vadd.f32 %v148, %v458
  %v460 = vpop.f32.mrb[0].mxu0
  %461 = vmatprep.mubr.f32.mxu0 0.0
  %462 = vmatmul.mubr.f32.gmra.mrb[0].mxu0 %v182
  %v463 = vpop.f32.mrb[0].mxu0
  %v464 = vadd.f32 %v148, %v463
  %v465 = vpop.f32.mrb[0].mxu0
  %466 = vmatprep.mubr.f32.mxu0 0.0
  %467 = vmatmul.mubr.f32.gmra.mrb[0].mxu0 %v185
  %v468 = vpop.f32.mrb[0].mxu0
  %v469 = vadd.f32 %v148, %v468
  %v470 = vpop.f32.mrb[0].mxu0
  %471 = vmatprep.mubr.f32.mxu0 0.0
  %472 = vmatmul.mubr.f32.gmra.mrb[0].mxu0 %v188
  %v473 = vpop.f32.mrb[0].mxu0
  %v474 = vadd.f32 %v148, %v473
  %v475 = vpop.f32.mrb[0].mxu0
  %476 = vmatprep.mubr.f32.mxu0 0.0
  %477 = vmatmul.mubr.f32.gmra.mrb[0].mxu0 %v191
  %v478 = vpop.f32.mrb[0].mxu0
  %v479 = vadd.f32 %v148, %v478
  %v480 = vpop.f32.mrb[0].mxu0
  %481 = vmatprep.mubr.f32.mxu0 0.0
  %482 = vmatmul.mubr.f32.gmra.mrb[0].mxu0 %v194
  %v483 = vpop.f32.mrb[0].mxu0
  %v484 = vadd.f32 %v148, %v483
  %v485 = vpop.f32.mrb[0].mxu0
  %486 = vmatprep.mubr.f32.mxu0 0.0
  %487 = vmatmul.mubr.f32.gmra.mrb[0].mxu0 %v197
  %v488 = vpop.f32.mrb[0].mxu0
  %v489 = vadd.f32 %v148, %v488
  %v490 = vpop.f32.mrb[0].mxu0
  %491 = vmatprep.mubr.f32.mxu0 0.0
  %492 = vmatmul.mubr.f32.gmra.mrb[0].mxu0 %v200
  %v493 = vpop.f32.mrb[0].mxu0
  %v494 = vadd.f32 %v148, %v493
  %v495 = vpop.f32.mrb[0].mxu0
  %496 = vmatprep.mubr.f32.mxu0 0.0
  %497 = vmatmul.mubr.f32.gmra.mrb[0].mxu0 %v203
  %v498 = vpop.f32.mrb[0].mxu0
  %v499 = vadd.f32 %v148, %v498
  %v500 = vpop.f32.mrb[0].mxu0
  %501 = vmatprep.mubr.f32.mxu0 0.0
  %502 = vmatmul.mubr.f32.gmra.mrb[0].mxu0 %v206
  %v503 = vpop.f32.mrb[0].mxu0
  %v504 = vadd.f32 %v148, %v503
  %v505 = vpop.f32.mrb[0].mxu0
  %506 = vmatprep.mubr.f32.mxu0 0.0
  %507 = vmatmul.mubr.f32.gmra.mrb[0].mxu0 %v209
  %v508 = vpop.f32.mrb[0].mxu0
  %v509 = vadd.f32 %v148, %v508
  %v510 = vpop.f32.mrb[0].mxu0
  %511 = vmatprep.mubr.f32.mxu0 0.0
  %512 = vmatmul.mubr.f32.gmra.mrb[0].mxu0 %v212
  %v513 = vpop.f32.mrb[0].mxu0
  %v514 = vadd.f32 %v148, %v513
  %v515 = vpop.f32.mrb[0].mxu0
  %516 = vmatprep.mubr.f32.mxu0 0.0
  %517 = vmatmul.mubr.f32.gmra.mrb[0].mxu0 %v215
  %v518 = vpop.f32.mrb[0].mxu0
  %v519 = vadd.f32 %v148, %v518
  %v520 = vpop.f32.mrb[0].mxu0
  %521 = vmatprep.mubr.f32.mxu0 0.0
  %522 = vmatmul.mubr.f32.gmra.mrb[0].mxu0 %v218
  %v523 = vpop.f32.mrb[0].mxu0
  %v524 = vadd.f32 %v148, %v523
  %v525 = vpop.f32.mrb[0].mxu0
  %526 = vmatprep.mubr.f32.mxu0 0.0
  %527 = vmatmul.mubr.f32.gmra.mrb[0].mxu0 %v221
  %v528 = vpop.f32.mrb[0].mxu0
  %v529 = vadd.f32 %v148, %v528
  %v530 = vpop.f32.mrb[0].mxu0
  %531 = vmatprep.mubr.f32.mxu0 0.0
  %532 = vmatmul.mubr.f32.gmra.mrb[0].mxu0 %v224
  %v533 = vpop.f32.mrb[0].mxu0
  %v534 = vadd.f32 %v148, %v533
  %v535 = vpop.f32.mrb[0].mxu0
  %536 = vmatprep.mubr.f32.mxu0 0.0
  %537 = vmatmul.mubr.f32.gmra.mrb[0].mxu0 %v227
  %v538 = vpop.f32.mrb[0].mxu0
  %v539 = vadd.f32 %v148, %v538
  %v540 = vpop.f32.mrb[0].mxu0
  %541 = vmatprep.mubr.f32.mxu0 0.0
  %542 = vmatmul.mubr.f32.gmra.mrb[0].mxu0 %v230
  %v543 = vpop.f32.mrb[0].mxu0
  %v544 = vadd.f32 %v148, %v543
  %v545 = vpop.f32.mrb[0].mxu0
  %546 = vmatprep.mubr.f32.mxu0 0.0
  %547 = vmatmul.mubr.f32.gmra.mrb[0].mxu0 %v233
  %v548 = vpop.f32.mrb[0].mxu0
  %v549 = vadd.f32 %v148, %v548
  %v550 = vpop.f32.mrb[0].mxu0
  %551 = vmatprep.mubr.f32.mxu0 0.0
  %552 = vmatmul.mubr.f32.gmra.mrb[0].mxu0 %v236
  %v553 = vpop.f32.mrb[0].mxu0
  %v554 = vadd.f32 %v148, %v553
  %v555 = vpop.f32.mrb[0].mxu0
  %556 = vmatprep.mubr.f32.mxu0 0.0
  %557 = vmatmul.mubr.f32.gmra.mrb[0].mxu0 %v239
  %v558 = vpop.f32.mrb[0].mxu0
  %v559 = vadd.f32 %v148, %v558
  %v560 = vpop.f32.mrb[0].mxu0
  %561 = vmatprep.mubr.f32.mxu0 0.0
  %562 = vmatmul.mubr.f32.gmra.mrb[0].mxu0 %v242
  %v563 = vpop.f32.mrb[0].mxu0
  %v564 = vadd.f32 %v148, %v563
  %v565 = vpop.f32.mrb[0].mxu0
  %566 = vmatprep.mubr.f32.mxu0 0.0
  %567 = vmatmul.mubr.f32.gmra.mrb[0].mxu0 %v245
  %v568 = vpop.f32.mrb[0].mxu0
  %v569 = vadd.f32 %v148, %v568
  %v570 = vpop.f32.mrb[0].mxu0
  %571 = vmatprep.mubr.f32.mxu0 0.0
  %572 = vmatmul.mubr.f32.gmra.mrb[0].mxu0 %v248
  %v573 = vpop.f32.mrb[0].mxu0
  %v574 = vadd.f32 %v148, %v573
  %v575 = vpop.f32.mrb[0].mxu0
  %576 = vmatprep.mubr.f32.mxu0 0.0
  %577 = vmatmul.mubr.f32.gmra.mrb[0].mxu0 %v251
  %v578 = vpop.f32.mrb[0].mxu0
  %v579 = vadd.f32 %v148, %v578
  %v580 = vpop.f32.mrb[0].mxu0
  %581 = vmatprep.mubr.f32.mxu0 0.0
  %582 = vmatmul.mubr.f32.gmra.mrb[0].mxu0 %v254
  %v583 = vpop.f32.mrb[0].mxu0
  %v584 = vadd.f32 %v148, %v583
  %v585 = vpop.f32.mrb[0].mxu0
  %586 = vmatprep.mubr.f32.mxu0 0.0
  %587 = vmatmul.mubr.f32.gmra.mrb[0].mxu0 %v257
  %v588 = vpop.f32.mrb[0].mxu0
  %v589 = vadd.f32 %v148, %v588
  %v590 = vpop.f32.mrb[0].mxu0
  %591 = vmatprep.mubr.f32.mxu0 0.0
  %592 = vmatmul.mubr.f32.gmra.mrb[0].mxu0 %v260
  %v593 = vpop.f32.mrb[0].mxu0
  %v594 = vadd.f32 %v148, %v593
  %v595 = vpop.f32.mrb[0].mxu0
  %596 = vmatprep.mubr.f32.mxu0 0.0
  %597 = vmatmul.mubr.f32.gmra.mrb[0].mxu0 %v263
  %v598 = vpop.f32.mrb[0].mxu0
  %v599 = vadd.f32 %v148, %v598
  %v600 = vpop.f32.mrb[0].mxu0
  %601 = vmatprep.mubr.f32.mxu0 0.0
  %602 = vmatmul.mubr.f32.gmra.mrb[0].mxu0 %v266
  %v603 = vpop.f32.mrb[0].mxu0
  %v604 = vadd.f32 %v148, %v603
  %v605 = vpop.f32.mrb[0].mxu0
  %606 = vmatprep.mubr.f32.mxu0 0.0
  %607 = vmatmul.mubr.f32.gmra.mrb[0].mxu0 %v269
  %v608 = vpop.f32.mrb[0].mxu0
  %v609 = vadd.f32 %v148, %v608
  %v610 = vpop.f32.mrb[0].mxu0
  %611 = vmatprep.mubr.f32.mxu0 0.0
  %612 = vmatmul.mubr.f32.gmra.mrb[0].mxu0 %v272
  %v613 = vpop.f32.mrb[0].mxu0
  %v614 = vadd.f32 %v148, %v613
  %v615 = vpop.f32.mrb[0].mxu0
  %616 = vmatprep.mubr.f32.mxu0 0.0
  %617 = vmatmul.mubr.f32.gmra.mrb[0].mxu0 %v275
  %v618 = vpop.f32.mrb[0].mxu0
  %v619 = vadd.f32 %v148, %v618
  %v620 = vpop.f32.mrb[0].mxu0
  %621 = vmatprep.mubr.f32.mxu0 0.0
  %622 = vmatmul.mubr.f32.gmra.mrb[0].mxu0 %v278
  %v623 = vpop.f32.mrb[0].mxu0
  %v624 = vadd.f32 %v148, %v623
  %v625 = vpop.f32.mrb[0].mxu0
  %626 = vmatprep.mubr.f32.mxu0 0.0
  %627 = vmatmul.mubr.f32.gmra.mrb[0].mxu0 %v281
  %v628 = vpop.f32.mrb[0].mxu0
  %v629 = vadd.f32 %v148, %v628
  %v630 = vpop.f32.mrb[0].mxu0
  %631 = vmatprep.mubr.f32.mxu0 0.0
  %632 = vmatmul.mubr.f32.gmra.mrb[0].mxu0 %v284
  %v633 = vpop.f32.mrb[0].mxu0
  %v634 = vadd.f32 %v148, %v633
  %v635 = vpop.f32.mrb[0].mxu0
  %636 = vmatprep.mubr.f32.mxu0 0.0
  %637 = vmatmul.mubr.f32.gmra.mrb[0].mxu0 %v287
  %v638 = vpop.f32.mrb[0].mxu0
  %v639 = vadd.f32 %v148, %v638
  %v640 = vpop.f32.mrb[0].mxu0
  %641 = vmatprep.mubr.f32.mxu0 0.0
  %642 = vmatmul.mubr.f32.gmra.mrb[0].mxu0 %v290
  %v643 = vpop.f32.mrb[0].mxu0
  %v644 = vadd.f32 %v148, %v643
  %v645 = vpop.f32.mrb[0].mxu0
  %646 = vmatprep.mubr.f32.mxu0 0.0
  %647 = vmatmul.mubr.f32.gmra.mrb[0].mxu0 %v293
  %v648 = vpop.f32.mrb[0].mxu0
  %v649 = vadd.f32 %v148, %v648
  %v650 = vpop.f32.mrb[0].mxu0
  %651 = vmatprep.mubr.f32.mxu0 0.0
  %652 = vmatmul.mubr.f32.gmra.mrb[0].mxu0 %v296
  %v653 = vpop.f32.mrb[0].mxu0
  %v654 = vadd.f32 %v148, %v653
  %v655 = vpop.f32.mrb[0].mxu0
  %656 = vmatprep.mubr.f32.mxu0 0.0
  %657 = vmatmul.mubr.f32.gmra.mrb[0].mxu0 %v299
  %v658 = vpop.f32.mrb[0].mxu0
  %v659 = vadd.f32 %v148, %v658
  %v660 = vpop.f32.mrb[0].mxu0
  %661 = vmatprep.mubr.f32.mxu0 0.0
  %662 = vmatmul.mubr.f32.gmra.mrb[0].mxu0 %v302
  %v663 = vpop.f32.mrb[0].mxu0
  %v664 = vadd.f32 %v148, %v663
  %v665 = vpop.f32.mrb[0].mxu0
  %666 = vmatprep.mubr.f32.mxu0 0.0
  %667 = vmatmul.mubr.f32.gmra.mrb[0].mxu0 %v305
  %v668 = vpop.f32.mrb[0].mxu0
  %v669 = vadd.f32 %v148, %v668
  %v670 = vpop.f32.mrb[0].mxu0
  %671 = vmatprep.mubr.f32.mxu0 0.0
  %672 = vmatmul.mubr.f32.gmra.mrb[0].mxu0 %v308
  %v673 = vpop.f32.mrb[0].mxu0
  %v674 = vadd.f32 %v148, %v673
  %v675 = vpop.f32.mrb[0].mxu0
  %676 = vmatprep.mubr.f32.mxu0 0.0
  %677 = vmatmul.mubr.f32.gmra.mrb[0].mxu0 %v311
  %v678 = vpop.f32.mrb[0].mxu0
  %v679 = vadd.f32 %v148, %v678
  %v680 = vpop.f32.mrb[0].mxu0
  %681 = vmatprep.mubr.f32.mxu0 0.0
  %682 = vmatmul.mubr.f32.gmra.mrb[0].mxu0 %v314
  %v683 = vpop.f32.mrb[0].mxu0
  %v684 = vadd.f32 %v148, %v683
  %v685 = vpop.f32.mrb[0].mxu0
  %686 = vmatprep.mubr.f32.mxu0 0.0
  %687 = vmatmul.mubr.f32.gmra.mrb[0].mxu0 %v317
  %v688 = vpop.f32.mrb[0].mxu0
  %v689 = vadd.f32 %v148, %v688
  %v690 = vpop.f32.mrb[0].mxu0
  %691 = vmatprep.mubr.f32.mxu0 0.0
  %692 = vmatmul.mubr.f32.gmra.mrb[0].mxu0 %v320
  %v693 = vpop.f32.mrb[0].mxu0
  %v694 = vadd.f32 %v148, %v693
  %v695 = vpop.f32.mrb[0].mxu0
  %696 = vmatprep.mubr.f32.mxu0 0.0
  %697 = vmatmul.mubr.f32.gmra.mrb[0].mxu0 %v323
  %v698 = vpop.f32.mrb[0].mxu0
  %v699 = vadd.f32 %v148, %v698
  %v700 = vpop.f32.mrb[0].mxu0
  %701 = vmatprep.mubr.f32.mxu0 0.0
  %702 = vmatmul.mubr.f32.gmra.mrb[0].mxu0 %v326
  %v703 = vpop.f32.mrb[0].mxu0
  %v704 = vadd.f32 %v148, %v703
  %v705 = vpop.f32.mrb[0].mxu0
  %706 = vmatprep.mubr.f32.mxu0 0.0
  %707 = vmatmul.mubr.f32.gmra.mrb[0].mxu0 %v329
  %v708 = vpop.f32.mrb[0].mxu0
  %v709 = vadd.f32 %v148, %v708
  %v710 = vpop.f32.mrb[0].mxu0
  %711 = vmatprep.mubr.f32.mxu0 0.0
  %712 = vmatmul.mubr.f32.gmra.mrb[0].mxu0 %v332
  %v713 = vpop.f32.mrb[0].mxu0
  %v714 = vadd.f32 %v148, %v713
  %v715 = vpop.f32.mrb[0].mxu0
  %716 = vmatprep.mubr.f32.mxu0 0.0
  %717 = vmatmul.mubr.f32.gmra.mrb[0].mxu0 %v335
  %v718 = vpop.f32.mrb[0].mxu0
  %v719 = vadd.f32 %v148, %v718
  %v720 = vpop.f32.mrb[0].mxu0
  %721 = vmatprep.mubr.f32.mxu0 0.0
  %722 = vmatmul.mubr.f32.gmra.mrb[0].mxu0 %v338
  %v723 = vpop.f32.mrb[0].mxu0
  %v724 = vadd.f32 %v148, %v723
  %v725 = vpop.f32.mrb[0].mxu0
  %726 = vmatprep.mubr.f32.mxu0 0.0
  %727 = vmatmul.mubr.f32.gmra.mrb[0].mxu0 %v341
  %v728 = vpop.f32.mrb[0].mxu0
  %v729 = vadd.f32 %v148, %v728
  %v730 = vpop.f32.mrb[0].mxu0
  %731 = vdwg.mxu0
  %v732 = vpack.c.bf16 %v419, %v414
  %v733 = vpack.c.bf16 %v429, %v424
  %v734 = vpack.c.bf16 %v439, %v434
  %v735 = vpack.c.bf16 %v449, %v444
  %v736 = vpack.c.bf16 %v459, %v454
  %v737 = vpack.c.bf16 %v469, %v464
  %v738 = vpack.c.bf16 %v479, %v474
  %v739 = vpack.c.bf16 %v489, %v484
  %v740 = vpack.c.bf16 %v499, %v494
  %v741 = vpack.c.bf16 %v509, %v504
  %v742 = vpack.c.bf16 %v519, %v514
  %v743 = vpack.c.bf16 %v529, %v524
  %v744 = vpack.c.bf16 %v539, %v534
  %v745 = vpack.c.bf16 %v549, %v544
  %v746 = vpack.c.bf16 %v559, %v554
  %v747 = vpack.c.bf16 %v569, %v564
  %v748 = vpack.c.bf16 %v579, %v574
  %v749 = vpack.c.bf16 %v589, %v584
  %v750 = vpack.c.bf16 %v599, %v594
  %v751 = vpack.c.bf16 %v609, %v604
  %v752 = vpack.c.bf16 %v619, %v614
  %v753 = vpack.c.bf16 %v629, %v624
  %v754 = vpack.c.bf16 %v639, %v634
  %v755 = vpack.c.bf16 %v649, %v644
  %v756 = vpack.c.bf16 %v659, %v654
  %v757 = vpack.c.bf16 %v669, %v664
  %v758 = vpack.c.bf16 %v679, %v674
  %v759 = vpack.c.bf16 %v689, %v684
  %v760 = vpack.c.bf16 %v699, %v694
  %v761 = vpack.c.bf16 %v709, %v704
  %v762 = vpack.c.bf16 %v719, %v714
  %v763 = vpack.c.bf16 %v729, %v724
  %v796 = vunpack.c.l.b16 %v732
  %v797 = vunpack.c.h.b16 %v732
  %v798 = vunpack.c.l.b16 %v733
  %v799 = vunpack.c.h.b16 %v733
  %v800 = vunpack.c.l.b16 %v734
  %v801 = vunpack.c.h.b16 %v734
  %v802 = vunpack.c.l.b16 %v735
  %v803 = vunpack.c.h.b16 %v735
  %v804 = vunpack.c.l.b16 %v736
  %v805 = vunpack.c.h.b16 %v736
  %v806 = vunpack.c.l.b16 %v737
  %v807 = vunpack.c.h.b16 %v737
  %v808 = vunpack.c.l.b16 %v738
  %v809 = vunpack.c.h.b16 %v738
  %v810 = vunpack.c.l.b16 %v739
  %v811 = vunpack.c.h.b16 %v739
  %v812 = vunpack.c.l.b16 %v740
  %v813 = vunpack.c.h.b16 %v740
  %v814 = vunpack.c.l.b16 %v741
  %v815 = vunpack.c.h.b16 %v741
  %v816 = vunpack.c.l.b16 %v742
  %v817 = vunpack.c.h.b16 %v742
  %v818 = vunpack.c.l.b16 %v743
  %v819 = vunpack.c.h.b16 %v743
  %v820 = vunpack.c.l.b16 %v744
  %v821 = vunpack.c.h.b16 %v744
  %v822 = vunpack.c.l.b16 %v745
  %v823 = vunpack.c.h.b16 %v745
  %v824 = vunpack.c.l.b16 %v746
  %v825 = vunpack.c.h.b16 %v746
  %v826 = vunpack.c.l.b16 %v747
  %v827 = vunpack.c.h.b16 %v747
  %v828 = vunpack.c.l.b16 %v748
  %v829 = vunpack.c.h.b16 %v748
  %v830 = vunpack.c.l.b16 %v749
  %v831 = vunpack.c.h.b16 %v749
  %v832 = vunpack.c.l.b16 %v750
  %v833 = vunpack.c.h.b16 %v750
  %v834 = vunpack.c.l.b16 %v751
  %v835 = vunpack.c.h.b16 %v751
  %v836 = vunpack.c.l.b16 %v752
  %v837 = vunpack.c.h.b16 %v752
  %v838 = vunpack.c.l.b16 %v753
  %v839 = vunpack.c.h.b16 %v753
  %v840 = vunpack.c.l.b16 %v754
  %v841 = vunpack.c.h.b16 %v754
  %v842 = vunpack.c.l.b16 %v755
  %v843 = vunpack.c.h.b16 %v755
  %v844 = vunpack.c.l.b16 %v756
  %v845 = vunpack.c.h.b16 %v756
  %v846 = vunpack.c.l.b16 %v757
  %v847 = vunpack.c.h.b16 %v757
  %v848 = vunpack.c.l.b16 %v758
  %v849 = vunpack.c.h.b16 %v758
  %v850 = vunpack.c.l.b16 %v759
  %v851 = vunpack.c.h.b16 %v759
  %v852 = vunpack.c.l.b16 %v760
  %v853 = vunpack.c.h.b16 %v760
  %v854 = vunpack.c.l.b16 %v761
  %v855 = vunpack.c.h.b16 %v761
  %v856 = vunpack.c.l.b16 %v762
  %v857 = vunpack.c.h.b16 %v762
  %v858 = vunpack.c.l.b16 %v763
  %v859 = vunpack.c.h.b16 %v763
  %v860 = vpack.c.b16 %v796, %v796
  %v861 = vpack.c.b16 %v797, %v797
  %v862 = vpack.c.b16 %v798, %v798
  %v863 = vpack.c.b16 %v799, %v799
  %v864 = vpack.c.b16 %v800, %v800
  %v865 = vpack.c.b16 %v801, %v801
  %v866 = vpack.c.b16 %v802, %v802
  %v867 = vpack.c.b16 %v803, %v803
  %v868 = vpack.c.b16 %v804, %v804
  %v869 = vpack.c.b16 %v805, %v805
  %v870 = vpack.c.b16 %v806, %v806
  %v871 = vpack.c.b16 %v807, %v807
  %v872 = vpack.c.b16 %v808, %v808
  %v873 = vpack.c.b16 %v809, %v809
  %v874 = vpack.c.b16 %v810, %v810
  %v875 = vpack.c.b16 %v811, %v811
  %v876 = vpack.c.b16 %v812, %v812
  %v877 = vpack.c.b16 %v813, %v813
  %v878 = vpack.c.b16 %v814, %v814
  %v879 = vpack.c.b16 %v815, %v815
  %v880 = vpack.c.b16 %v816, %v816
  %v881 = vpack.c.b16 %v817, %v817
  %v882 = vpack.c.b16 %v818, %v818
  %v883 = vpack.c.b16 %v819, %v819
  %v884 = vpack.c.b16 %v820, %v820
  %v885 = vpack.c.b16 %v821, %v821
  %v886 = vpack.c.b16 %v822, %v822
  %v887 = vpack.c.b16 %v823, %v823
  %v888 = vpack.c.b16 %v824, %v824
  %v889 = vpack.c.b16 %v825, %v825
  %v890 = vpack.c.b16 %v826, %v826
  %v891 = vpack.c.b16 %v827, %v827
  %v892 = vpack.c.b16 %v828, %v828
  %v893 = vpack.c.b16 %v829, %v829
  %v894 = vpack.c.b16 %v830, %v830
  %v895 = vpack.c.b16 %v831, %v831
  %v896 = vpack.c.b16 %v832, %v832
  %v897 = vpack.c.b16 %v833, %v833
  %v898 = vpack.c.b16 %v834, %v834
  %v899 = vpack.c.b16 %v835, %v835
  %v900 = vpack.c.b16 %v836, %v836
  %v901 = vpack.c.b16 %v837, %v837
  %v902 = vpack.c.b16 %v838, %v838
  %v903 = vpack.c.b16 %v839, %v839
  %v904 = vpack.c.b16 %v840, %v840
  %v905 = vpack.c.b16 %v841, %v841
  %v906 = vpack.c.b16 %v842, %v842
  %v907 = vpack.c.b16 %v843, %v843
  %v908 = vpack.c.b16 %v844, %v844
  %v909 = vpack.c.b16 %v845, %v845
  %v910 = vpack.c.b16 %v846, %v846
  %v911 = vpack.c.b16 %v847, %v847
  %v912 = vpack.c.b16 %v848, %v848
  %v913 = vpack.c.b16 %v849, %v849
  %v914 = vpack.c.b16 %v850, %v850
  %v915 = vpack.c.b16 %v851, %v851
  %v916 = vpack.c.b16 %v852, %v852
  %v917 = vpack.c.b16 %v853, %v853
  %v918 = vpack.c.b16 %v854, %v854
  %v919 = vpack.c.b16 %v855, %v855
  %v920 = vpack.c.b16 %v856, %v856
  %v921 = vpack.c.b16 %v857, %v857
  %v922 = vpack.c.b16 %v858, %v858
  %v923 = vpack.c.b16 %v859, %v859
  %vm988 = vcmask 60416
  %989 = vst.msk [vmem:[%s3] sm:$0xf] %vm988, %v860
  %990 = vst.msk [vmem:[%s3 + $0x4] sm:$0xf] %vm988, %v861
  %991 = vst.msk [vmem:[%s3 + $0x8] sm:$0xf] %vm988, %v862
  %992 = vst.msk [vmem:[%s3 + $0xc] sm:$0xf] %vm988, %v863
  %993 = vst.msk [vmem:[%s3 + $0x10] sm:$0xf] %vm988, %v864
  %994 = vst.msk [vmem:[%s3 + $0x14] sm:$0xf] %vm988, %v865
  %995 = vst.msk [vmem:[%s3 + $0x18] sm:$0xf] %vm988, %v866
  %996 = vst.msk [vmem:[%s3 + $0x1c] sm:$0xf] %vm988, %v867
  %997 = vst.msk [vmem:[%s3 + $0x20] sm:$0xf] %vm988, %v868
  %998 = vst.msk [vmem:[%s3 + $0x24] sm:$0xf] %vm988, %v869
  %999 = vst.msk [vmem:[%s3 + $0x28] sm:$0xf] %vm988, %v870
  %1000 = vst.msk [vmem:[%s3 + $0x2c] sm:$0xf] %vm988, %v871
  %1001 = vst.msk [vmem:[%s3 + $0x30] sm:$0xf] %vm988, %v872
  %1002 = vst.msk [vmem:[%s3 + $0x34] sm:$0xf] %vm988, %v873
  %1003 = vst.msk [vmem:[%s3 + $0x38] sm:$0xf] %vm988, %v874
  %1004 = vst.msk [vmem:[%s3 + $0x3c] sm:$0xf] %vm988, %v875
  %1005 = vst.msk [vmem:[%s3 + $0x40] sm:$0xf] %vm988, %v876
  %1006 = vst.msk [vmem:[%s3 + $0x44] sm:$0xf] %vm988, %v877
  %1007 = vst.msk [vmem:[%s3 + $0x48] sm:$0xf] %vm988, %v878
  %1008 = vst.msk [vmem:[%s3 + $0x4c] sm:$0xf] %vm988, %v879
  %1009 = vst.msk [vmem:[%s3 + $0x50] sm:$0xf] %vm988, %v880
  %1010 = vst.msk [vmem:[%s3 + $0x54] sm:$0xf] %vm988, %v881
  %1011 = vst.msk [vmem:[%s3 + $0x58] sm:$0xf] %vm988, %v882
  %1012 = vst.msk [vmem:[%s3 + $0x5c] sm:$0xf] %vm988, %v883
  %1013 = vst.msk [vmem:[%s3 + $0x60] sm:$0xf] %vm988, %v884
  %1014 = vst.msk [vmem:[%s3 + $0x64] sm:$0xf] %vm988, %v885
  %1015 = vst.msk [vmem:[%s3 + $0x68] sm:$0xf] %vm988, %v886
  %1016 = vst.msk [vmem:[%s3 + $0x6c] sm:$0xf] %vm988, %v887
  %1017 = vst.msk [vmem:[%s3 + $0x70] sm:$0xf] %vm988, %v888
  %1018 = vst.msk [vmem:[%s3 + $0x74] sm:$0xf] %vm988, %v889
  %1019 = vst.msk [vmem:[%s3 + $0x78] sm:$0xf] %vm988, %v890
  %1020 = vst.msk [vmem:[%s3 + $0x7c] sm:$0xf] %vm988, %v891
  %1021 = vst.msk [vmem:[%s3 + $0x80] sm:$0xf] %vm988, %v892
  %1022 = vst.msk [vmem:[%s3 + $0x84] sm:$0xf] %vm988, %v893
  %1023 = vst.msk [vmem:[%s3 + $0x88] sm:$0xf] %vm988, %v894
  %1024 = vst.msk [vmem:[%s3 + $0x8c] sm:$0xf] %vm988, %v895
  %1025 = vst.msk [vmem:[%s3 + $0x90] sm:$0xf] %vm988, %v896
  %1026 = vst.msk [vmem:[%s3 + $0x94] sm:$0xf] %vm988, %v897
  %1027 = vst.msk [vmem:[%s3 + $0x98] sm:$0xf] %vm988, %v898
  %1028 = vst.msk [vmem:[%s3 + $0x9c] sm:$0xf] %vm988, %v899
  %1029 = vst.msk [vmem:[%s3 + $0xa0] sm:$0xf] %vm988, %v900
  %1030 = vst.msk [vmem:[%s3 + $0xa4] sm:$0xf] %vm988, %v901
  %1031 = vst.msk [vmem:[%s3 + $0xa8] sm:$0xf] %vm988, %v902
  %1032 = vst.msk [vmem:[%s3 + $0xac] sm:$0xf] %vm988, %v903
  %1033 = vst.msk [vmem:[%s3 + $0xb0] sm:$0xf] %vm988, %v904
  %1034 = vst.msk [vmem:[%s3 + $0xb4] sm:$0xf] %vm988, %v905
  %1035 = vst.msk [vmem:[%s3 + $0xb8] sm:$0xf] %vm988, %v906
  %1036 = vst.msk [vmem:[%s3 + $0xbc] sm:$0xf] %vm988, %v907
  %1037 = vst.msk [vmem:[%s3 + $0xc0] sm:$0xf] %vm988, %v908
  %1038 = vst.msk [vmem:[%s3 + $0xc4] sm:$0xf] %vm988, %v909
  %1039 = vst.msk [vmem:[%s3 + $0xc8] sm:$0xf] %vm988, %v910
  %1040 = vst.msk [vmem:[%s3 + $0xcc] sm:$0xf] %vm988, %v911
  %1041 = vst.msk [vmem:[%s3 + $0xd0] sm:$0xf] %vm988, %v912
  %1042 = vst.msk [vmem:[%s3 + $0xd4] sm:$0xf] %vm988, %v913
  %1043 = vst.msk [vmem:[%s3 + $0xd8] sm:$0xf] %vm988, %v914
  %1044 = vst.msk [vmem:[%s3 + $0xdc] sm:$0xf] %vm988, %v915
  %1045 = vst.msk [vmem:[%s3 + $0xe0] sm:$0xf] %vm988, %v916
  %1046 = vst.msk [vmem:[%s3 + $0xe4] sm:$0xf] %vm988, %v917
  %1047 = vst.msk [vmem:[%s3 + $0xe8] sm:$0xf] %vm988, %v918
  %1048 = vst.msk [vmem:[%s3 + $0xec] sm:$0xf] %vm988, %v919
  %1049 = vst.msk [vmem:[%s3 + $0xf0] sm:$0xf] %vm988, %v920
  %1050 = vst.msk [vmem:[%s3 + $0xf4] sm:$0xf] %vm988, %v921
  %1051 = vst.msk [vmem:[%s3 + $0xf8] sm:$0xf] %vm988, %v922
  %1052 = vst.msk [vmem:[%s3 + $0xfc] sm:$0xf] %vm988, %v923
  // Predicated region
  $region14: #{tpu_custom_call.1} parent=0 // pred_check
    _
  $region15: #{tpu_custom_call.1} parent=0 // pred_check_branch
    %1054 = sbr.rel (0) target = $region17
  $region16: #{tpu_custom_call.1} parent=0 // pred_region
    _
  $region17: #{tpu_custom_call.1} parent=0 // pred_fallthru
    _
  // Predicated region
  $region18: #{tpu_custom_call.1} parent=0 // pred_check
    _
  $region19: #{tpu_custom_call.1} parent=0 // pred_check_branch
    %1056 = sbr.rel (0) target = $region21
  $region20: #{tpu_custom_call.1} parent=0 // pred_region
    _
  $region21: #{tpu_custom_call.1} parent=0 // pred_fallthru
    _

</llo_original>
